<compile_context>
chip_gen: v7x
topology: tpu7x:2x2x1
jax: 0.10.0
libtpu: 0.0.40
codegen_flags: <defaults>
</compile_context>

<pallas_src>
import jax
import jax.numpy as jnp
from jax.experimental import pallas as pl
from jax.experimental.pallas import tpu as pltpu


def _round_up(x, m):
    return ((x + m - 1) // m) * m


def _vmem_budget_bytes():
    """~85% of physical VMEM (leaves headroom for compiler internals)."""
    default = 96 * 1024 * 1024
    try:
        info = pltpu.get_tpu_info()
        phys = getattr(info, "vmem_capacity_bytes", None)
        if not phys:
            return default
        return int(phys * 0.85)
    except Exception:
        return default


def glu_kernel(x_ref, w12_ref, w3_ref, o_ref, acc_ref):
    # x_ref:   (tm, d1p)        row tile of the input (constant along j)
    # w12_ref: (d1p, 2*td2)     contiguous [w1_j | w2_j] tile (leading dim squeezed)
    # w3_ref:  (td2, d1p)       row tile j of the down projection
    # o_ref:   (tm, d1p)        output row tile (same block for every j)
    # acc_ref: (tm, d1p) f32    VMEM accumulator over the d2 axis
    j = pl.program_id(1)
    nj = pl.num_programs(1)
    td2 = w3_ref.shape[0]

    x = x_ref[...]

    # One wide MXU pass produces both gate projections for this d2 tile.
    o12 = jnp.dot(x, w12_ref[...], preferred_element_type=jnp.float32)
    o1 = o12[:, :td2]
    o2 = o12[:, td2:]

    # swish(o1) * o2 in f32; logistic lowers to the EUP slot (exp + recip).
    gated = o1 * jax.lax.logistic(o1) * o2

    # Down-projection contribution for this d2 tile.
    contrib = jnp.dot(gated.astype(w3_ref.dtype), w3_ref[...],
                      preferred_element_type=jnp.float32)

    # First step assigns (no zero-init + RMW); later steps accumulate.
    @pl.when(j == 0)
    def _first():
        acc_ref[...] = contrib

    @pl.when(j > 0)
    def _rest():
        acc_ref[...] += contrib

    @pl.when(j == nj - 1)
    def _finalize():
        o_ref[...] = acc_ref[...].astype(o_ref.dtype)


class PallasGLU:
    """GLU forward with weights prepared (padded + interleaved) once."""

    def __init__(self, w1, w2, w3, *, tm=512, td2=512):
        # w1, w2: (d1, d2); w3: (d2, d1)  -- transposed torch Linear weights,
        # so the kernel computes x @ W directly.
        d1, d2 = w1.shape
        assert w2.shape == (d1, d2) and w3.shape == (d2, d1)
        self.d1, self.d2 = d1, d2
        self.dtype = w1.dtype
        self.itemsize = jnp.dtype(self.dtype).itemsize
        self.sub = 16 if self.dtype == jnp.bfloat16 else 8
        self.tm_req = max(self.sub, (tm // self.sub) * self.sub)
        self.vmem_budget = _vmem_budget_bytes()

        # Lane-align d1/d2 to 128.
        d1p = _round_up(d1, 128)
        d2p = _round_up(d2, 128)

        # td2: largest multiple of 128 <= requested that divides d2p (no
        # over-padding of the hidden dim), then shrunk until the
        # double-buffered weight tiles take <= ~40% of the VMEM budget.
        divisors = [c for c in range(128, d2p + 1, 128) if d2p % c == 0]
        cands = [c for c in divisors if c <= td2] or [128]
        td2_sel = max(cands)
        while td2_sel > 128:
            wbytes = 6 * d1p * td2_sel * self.itemsize  # 2*(d1p*2td2) + 2*(td2*d1p)
            if wbytes <= 0.4 * self.vmem_budget:
                break
            smaller = [c for c in divisors if c < td2_sel]
            if not smaller:
                break
            td2_sel = max(smaller)
        self.td2 = td2_sel
        self.d1p, self.d2p = d1p, d2p
        self.nb = d2p // td2_sel
        self.weight_tile_bytes = 6 * d1p * td2_sel * self.itemsize

        # ---- One-time weight preparation (hoisted out of the call path) ----
        # Zero padding is exact: zero rows/cols contribute nothing, and padded
        # d2 lanes give gate = swish(0) * 0 = 0 before the down projection.
        w1_p = jnp.zeros((d1p, d2p), self.dtype).at[:d1, :d2].set(w1)
        w2_p = jnp.zeros((d1p, d2p), self.dtype).at[:d1, :d2].set(w2)
        w3_p = jnp.zeros((d2p, d1p), self.dtype).at[:d2, :d1].set(w3)

        # (nb, d1p, 2*td2): block j is a contiguous [w1_j | w2_j] slab.
        w1_t = w1_p.reshape(d1p, self.nb, td2_sel).transpose(1, 0, 2)
        w2_t = w2_p.reshape(d1p, self.nb, td2_sel).transpose(1, 0, 2)
        self.w12 = jax.block_until_ready(
            jnp.concatenate([w1_t, w2_t], axis=-1))
        self.w3_p = jax.block_until_ready(w3_p)

    def _pick_tm(self, n):
        """Largest row tile (multiple of sublane) that fits the VMEM budget."""
        sub = self.sub
        rem = self.vmem_budget - self.weight_tile_bytes
        # Per-row VMEM: x (double buffered) + out (double buffered) + f32 acc.
        per_row = self.d1p * (4 * self.itemsize + 4)
        tm_cap = max(sub, (max(rem, 0) // per_row // sub) * sub)
        tm = min(self.tm_req, tm_cap, _round_up(n, sub))
        return max(sub, (tm // sub) * sub)

    def __call__(self, x):
        orig_shape = x.shape
        d1, d1p, d2p, td2, nb = self.d1, self.d1p, self.d2p, self.td2, self.nb
        dtype, itemsize = self.dtype, self.itemsize
        assert orig_shape[-1] == d1

        x2d = x.astype(dtype).reshape(-1, d1)
        n = x2d.shape[0]

        tm = self._pick_tm(n)
        n_pad = _round_up(n, tm)

        # Fast path: skip the activation padding copy when already aligned.
        if n_pad == n and d1p == d1:
            x_p = x2d
        else:
            x_p = jnp.zeros((n_pad, d1p), dtype).at[:n, :d1].set(x2d)

        n_row_tiles = n_pad // tm
        cost = pl.CostEstimate(
            flops=int(6 * n_pad * d1p * d2p),            # 3 matmuls, padded dims
            transcendentals=int(n_pad * d2p),            # sigmoid
            bytes_accessed=int((2 * n_pad * d1p          # read x + write out
                                + n_row_tiles * 3 * d1p * d2p)  # weight re-stream
                               * itemsize),
        )

        out = pl.pallas_call(
            glu_kernel,
            out_shape=jax.ShapeDtypeStruct((n_pad, d1p), dtype),
            grid_spec=pltpu.PrefetchScalarGridSpec(
                num_scalar_prefetch=0,
                grid=(n_row_tiles, nb),          # rows parallel, d2 reduction last
                in_specs=[
                    pl.BlockSpec((tm, d1p), lambda i, j: (i, 0)),
                    # Leading dim squeezed -> kernel sees (d1p, 2*td2); each
                    # weight block is fully contiguous in HBM.
                    pl.BlockSpec((None, d1p, 2 * td2), lambda i, j: (j, 0, 0)),
                    pl.BlockSpec((td2, d1p), lambda i, j: (j, 0)),
                ],
                out_specs=pl.BlockSpec((tm, d1p), lambda i, j: (i, 0)),
                scratch_shapes=[pltpu.VMEM((tm, d1p), jnp.float32)],
            ),
            compiler_params=pltpu.CompilerParams(
                dimension_semantics=("parallel", "arbitrary"),
                vmem_limit_bytes=int(self.vmem_budget),
            ),
            cost_estimate=cost,
        )(x_p, self.w12, self.w3_p)

        if n_pad == n and d1p == d1:
            return out.reshape(orig_shape)
        return out[:n, :d1].reshape(orig_shape)


def glu_forward(x, w1, w2, w3, *, tm=512, td2=512):
    """One-shot convenience wrapper (prepares weights on every call)."""
    return PallasGLU(w1, w2, w3, tm=tm, td2=td2)(x)


def glu_reference(x, w1, w2, w3):
    o1 = x @ w1
    o2 = x @ w2
    return (o1 * jax.nn.sigmoid(o1) * o2) @ w3


if __name__ == "__main__":
    # Small shapes consistent with the module: d1=32, d2=64, batch=2, seq=8.
    batch, seq, d1, d2 = 2, 8, 32, 64

    key = jax.random.PRNGKey(0)
    kx, k1, k2, k3 = jax.random.split(key, 4)

    x = jax.random.normal(kx, (batch, seq, d1), dtype=jnp.float32)
    # torch Linear weight is (out, in); we store the transpose (in, out) so
    # the kernel computes x @ W directly.
    w1 = jax.random.normal(k1, (d1, d2), dtype=jnp.float32) * (1.0 / d1 ** 0.5)
    w2 = jax.random.normal(k2, (d1, d2), dtype=jnp.float32) * (1.0 / d1 ** 0.5)
    w3 = jax.random.normal(k3, (d2, d1), dtype=jnp.float32) * (1.0 / d2 ** 0.5)

    glu = PallasGLU(w1, w2, w3)   # weights padded/interleaved once

    out = jax.block_until_ready(glu(x))
    ref = glu_reference(x, w1, w2, w3)
    assert out.shape == x.shape
    assert jnp.allclose(out, ref, atol=2e-4, rtol=2e-4), "mismatch vs reference"

    # Second check: row count not a multiple of the sublane/row tile (padding path).
    x_odd = jax.random.normal(kx, (3, 5, d1), dtype=jnp.float32)
    out_odd = jax.block_until_ready(glu(x_odd))
    ref_odd = glu_reference(x_odd, w1, w2, w3)
    assert jnp.allclose(out_odd, ref_odd, atol=2e-4, rtol=2e-4), "mismatch (odd rows)"

    print("KERNEL_OK")
</pallas_src>

<mosaic_0001>
module attributes {stable_mosaic.version = 11 : i64} {
  func.func @glu_kernel(%arg0: i32, %arg1: i32, %arg2: memref<16x128xf32, #tpu.memory_space<vmem>>, %arg3: memref<1x128x256xf32, #tpu.memory_space<vmem>>, %arg4: memref<128x128xf32, #tpu.memory_space<vmem>>, %arg5: memref<16x128xf32, #tpu.memory_space<vmem>>, %arg6: memref<16x128xf32, #tpu.memory_space<vmem>>) attributes {dimension_semantics = [#tpu.dimension_semantics<parallel>, #tpu.dimension_semantics<arbitrary>], iteration_bounds = array<i64: 1, 1>, scalar_prefetch = 0 : i64, scratch_operands = 1 : i64, tpu.core_type = #tpu.core_type<tc>, window_params = [{transform_indices = @transform_0, window_bounds = array<i64: 16, 128>}, {transform_indices = @transform_1, window_bounds = array<i64: 1, 128, 256>}, {transform_indices = @transform_2, window_bounds = array<i64: 128, 128>}, {transform_indices = @transform_3, window_bounds = array<i64: 16, 128>}]} {
    %c0 = arith.constant 0 : index
    %c0_0 = arith.constant 0 : index
    %0 = vector.load %arg2[%c0, %c0_0] : memref<16x128xf32, #tpu.memory_space<vmem>>, vector<16x128xf32>
    %c0_1 = arith.constant 0 : index
    %c0_2 = arith.constant 0 : index
    %c0_3 = arith.constant 0 : index
    %1 = vector.load %arg3[%c0_1, %c0_2, %c0_3] : memref<1x128x256xf32, #tpu.memory_space<vmem>>, vector<1x128x256xf32>
    %2 = vector.shape_cast %1 : vector<1x128x256xf32> to vector<128x256xf32>
    %cst = arith.constant dense<0.000000e+00> : vector<16x256xf32>
    %3 = tpu.matmul %0, %2, %cst {dimension_numbers = #tpu.dot_dimension_numbers<[1], [0], [0], [1], [0, 0, 1, 1], [], []>} : vector<16x128xf32>, vector<128x256xf32>, vector<16x256xf32> -> vector<16x256xf32>
    %4 = vector.extract_strided_slice %3 {offsets = [0, 0], sizes = [16, 128], strides = [1, 1]} : vector<16x256xf32> to vector<16x128xf32>
    %5 = vector.extract_strided_slice %3 {offsets = [0, 128], sizes = [16, 128], strides = [1, 1]} : vector<16x256xf32> to vector<16x128xf32>
    %6 = arith.negf %4 : vector<16x128xf32>
    %7 = math.exp %6 : vector<16x128xf32>
    %cst_4 = arith.constant 1.000000e+00 : f32
    %8 = vector.broadcast %cst_4 : f32 to vector<16x128xf32>
    %9 = arith.addf %8, %7 : vector<16x128xf32>
    %10 = arith.divf %8, %9 : vector<16x128xf32>
    %11 = arith.mulf %4, %10 : vector<16x128xf32>
    %12 = arith.mulf %11, %5 : vector<16x128xf32>
    %c0_5 = arith.constant 0 : index
    %c0_6 = arith.constant 0 : index
    %13 = vector.load %arg4[%c0_5, %c0_6] : memref<128x128xf32, #tpu.memory_space<vmem>>, vector<128x128xf32>
    %cst_7 = arith.constant dense<0.000000e+00> : vector<16x128xf32>
    %14 = tpu.matmul %12, %13, %cst_7 {dimension_numbers = #tpu.dot_dimension_numbers<[1], [0], [0], [1], [0, 0, 1, 1], [], []>} : vector<16x128xf32>, vector<128x128xf32>, vector<16x128xf32> -> vector<16x128xf32>
    %c0_i32 = arith.constant 0 : i32
    %15 = arith.cmpi eq, %arg1, %c0_i32 : i32
    %16 = arith.extui %15 : i1 to i32
    %c0_i32_8 = arith.constant 0 : i32
    %17 = arith.cmpi ne, %16, %c0_i32_8 : i32
    scf.if %17 {
      %c0_13 = arith.constant 0 : index
      %c0_14 = arith.constant 0 : index
      %24 = vector.load %arg6[%c0_13, %c0_14] : memref<16x128xf32, #tpu.memory_space<vmem>>, vector<16x128xf32>
      tpu.vector_store %arg6[%c0_13, %c0_14], %14 {strides = array<i32>} : memref<16x128xf32, #tpu.memory_space<vmem>>, vector<16x128xf32>,
    } else {
    }
    %c0_i32_9 = arith.constant 0 : i32
    %18 = arith.cmpi sgt, %arg1, %c0_i32_9 : i32
    %19 = arith.extui %18 : i1 to i32
    %c0_i32_10 = arith.constant 0 : i32
    %20 = arith.cmpi ne, %19, %c0_i32_10 : i32
    scf.if %20 {
      %c0_13 = arith.constant 0 : index
      %c0_14 = arith.constant 0 : index
      %24 = vector.load %arg6[%c0_13, %c0_14] : memref<16x128xf32, #tpu.memory_space<vmem>>, vector<16x128xf32>
      %25 = arith.addf %24, %14 : vector<16x128xf32>
      %c0_15 = arith.constant 0 : index
      %c0_16 = arith.constant 0 : index
      %26 = vector.load %arg6[%c0_15, %c0_16] : memref<16x128xf32, #tpu.memory_space<vmem>>, vector<16x128xf32>
      tpu.vector_store %arg6[%c0_15, %c0_16], %25 {strides = array<i32>} : memref<16x128xf32, #tpu.memory_space<vmem>>, vector<16x128xf32>,
    } else {
    }
    %c0_i32_11 = arith.constant 0 : i32
    %21 = arith.cmpi eq, %arg1, %c0_i32_11 : i32
    %22 = arith.extui %21 : i1 to i32
    %c0_i32_12 = arith.constant 0 : i32
    %23 = arith.cmpi ne, %22, %c0_i32_12 : i32
    scf.if %23 {
      %c0_13 = arith.constant 0 : index
      %c0_14 = arith.constant 0 : index
      %24 = vector.load %arg6[%c0_13, %c0_14] : memref<16x128xf32, #tpu.memory_space<vmem>>, vector<16x128xf32>
      %c0_15 = arith.constant 0 : index
      %c0_16 = arith.constant 0 : index
      %25 = vector.load %arg5[%c0_15, %c0_16] : memref<16x128xf32, #tpu.memory_space<vmem>>, vector<16x128xf32>
      tpu.vector_store %arg5[%c0_15, %c0_16], %24 {strides = array<i32>} : memref<16x128xf32, #tpu.memory_space<vmem>>, vector<16x128xf32>,
    } else {
    }
    return
  }
  func.func @transform_0(%arg0: i32, %arg1: i32) -> (i32, i32) {
    %c0_i32 = arith.constant 0 : i32
    %c0_i32_0 = arith.constant 0 : i32
    return %arg0, %c0_i32 : i32, i32
  }
  func.func @transform_1(%arg0: i32, %arg1: i32) -> (i32, i32, i32) {
    %c0_i32 = arith.constant 0 : i32
    %c0_i32_0 = arith.constant 0 : i32
    %c0_i32_1 = arith.constant 0 : i32
    return %arg1, %c0_i32, %c0_i32_0 : i32, i32, i32
  }
  func.func @transform_2(%arg0: i32, %arg1: i32) -> (i32, i32) {
    %c0_i32 = arith.constant 0 : i32
    %c0_i32_0 = arith.constant 0 : i32
    return %arg1, %c0_i32 : i32, i32
  }
  func.func @transform_3(%arg0: i32, %arg1: i32) -> (i32, i32) {
    %c0_i32 = arith.constant 0 : i32
    %c0_i32_0 = arith.constant 0 : i32
    return %arg0, %c0_i32 : i32, i32
  }
}

</mosaic_0001>

<llo_original>
// kernel: tpu_custom_call.1
$region0: #{tpu_custom_call.1}
  #allocation0 [shape = 'u32[]', space=smem, size = 0x4, offset = 0x4, fixed_abs, tag = 'smem constant byte address 0x4 - core index']
  #allocation1 [shape = 'u32[144,128]{1,0:T(1,128)}', space=vmem, size = 0x12000, scoped, tag = 'internal scratch']
  #allocation2 [shape = 'f32[16,128]{1,0:T(8,128)}', space=vmem, size = 0x2000, scoped, tag = 'scratch operand']
  %s0 = inlined_call_operand.hbm [shape: f32[16,128], index: 0, kind: input, shape index: {}]
  %s1 = inlined_call_operand.hbm [shape: f32[1,128,256], index: 1, kind: input, shape index: {}]
  %s2 = inlined_call_operand.hbm [shape: f32[128,128], index: 2, kind: input, shape index: {}]
  %s3 = inlined_call_operand.hbm [shape: f32[16,128], index: 3, kind: output, shape index: {}]
  %s4 = sld [smem:[#allocation0]]
  $region46: #{tpu_custom_call.1} parent=0
    _
  %s6 = ssub.s32 1, %s4
  %s7 = scalar_select 0, %s6, %s4
  $region1: #{tpu_custom_call.1} parent=0
    #allocation3 [shape = 'u8[8192]{0}', space=vmem, size = 0x2000, scoped, tag = 'input window, operand 0, single buffered']
    #allocation4 [shape = 's32[1]{0}', space=sflag, size = 0x4, scoped, tag = 'scoped memory for tpu_custom_call.1']
    #allocation5 [shape = 's32[1]{0}', space=sflag, size = 0x4, scoped, tag = 'scoped memory for tpu_custom_call.1']
    #allocation6 [shape = 'u8[131072]{0}', space=vmem, size = 0x20000, scoped, tag = 'input window, operand 1, single buffered']
    #allocation7 [shape = 's32[1]{0}', space=sflag, size = 0x4, scoped, tag = 'scoped memory for tpu_custom_call.1']
    #allocation8 [shape = 'u8[65536]{0}', space=vmem, size = 0x10000, scoped, tag = 'input window, operand 2, single buffered']
    #allocation9 [shape = 'u8[8192]{0}', space=vmem, size = 0x2000, scoped, tag = 'output window, operand 0, single buffered']
    %8 = vsyncpa [#allocation4], 0
    %9 = vsyncpa [#allocation7], 0
    %10 = vsyncpa [#allocation5], 0
    // Predicated region
    $region2: #{tpu_custom_call.1} parent=1 // pred_check
      _
    $region3: #{tpu_custom_call.1} parent=1 // pred_check_branch
      %12 = sbr.rel (0) target = $region5
    $region4: #{tpu_custom_call.1} parent=1 // pred_region
      %s14 = ssub.s32 256, 256
      %15 = vsyncadd [#allocation4], %s14
      %s16 = sshll.u32 [#allocation3], 4
      %s17 = int_to_ptr.vmem [resolvable:$true] %s16
      %22 = dma.hbm_to_vmem [thread:$0]  %s0, 256, %s17, [#allocation4], 128, 128, 8
    $region5: #{tpu_custom_call.1} parent=1 // pred_fallthru
      _
    // Predicated region
    $region6: #{tpu_custom_call.1} parent=1 // pred_check
      _
    $region7: #{tpu_custom_call.1} parent=1 // pred_check_branch
      %24 = sbr.rel (0) target = $region9
    $region8: #{tpu_custom_call.1} parent=1 // pred_region
      %s26 = ssub.s32 4096, 4096
      %27 = vsyncadd [#allocation7], %s26
      %s28 = sshll.u32 [#allocation6], 4
      %s29 = int_to_ptr.vmem [resolvable:$true] %s28
      %34 = dma.hbm_to_vmem [thread:$0]  %s1, 4096, %s29, [#allocation7], 256, 256, 16
    $region9: #{tpu_custom_call.1} parent=1 // pred_fallthru
      _
    // Predicated region
    $region10: #{tpu_custom_call.1} parent=1 // pred_check
      _
    $region11: #{tpu_custom_call.1} parent=1 // pred_check_branch
      %36 = sbr.rel (0) target = $region13
    $region12: #{tpu_custom_call.1} parent=1 // pred_region
      %s38 = ssub.s32 2048, 2048
      %39 = vsyncadd [#allocation7], %s38
      %s40 = sshll.u32 [#allocation8], 4
      %s41 = int_to_ptr.vmem [resolvable:$true] %s40
      %46 = dma.hbm_to_vmem [thread:$0]  %s2, 2048, %s41, [#allocation7], 128, 128, 8
    $region13: #{tpu_custom_call.1} parent=1 // pred_fallthru
      _
    // Predicated region
    $region14: #{tpu_custom_call.1} parent=1 // pred_check
      _
    $region15: #{tpu_custom_call.1} parent=1 // pred_check_branch
      %48 = sbr.rel (0) target = $region17
    $region16: #{tpu_custom_call.1} parent=1 // pred_region
      %49 = dma.done [#allocation4], 256
    $region17: #{tpu_custom_call.1} parent=1 // pred_fallthru
      _
    // Predicated region
    $region18: #{tpu_custom_call.1} parent=1 // pred_check
      _
    $region19: #{tpu_custom_call.1} parent=1 // pred_check_branch
      %51 = sbr.rel (0) target = $region21
    $region20: #{tpu_custom_call.1} parent=1 // pred_region
      %52 = dma.done [#allocation7], 4096
    $region21: #{tpu_custom_call.1} parent=1 // pred_fallthru
      _
    // Predicated region
    $region22: #{tpu_custom_call.1} parent=1 // pred_check
      _
    $region23: #{tpu_custom_call.1} parent=1 // pred_check_branch
      %54 = sbr.rel (0) target = $region25
    $region24: #{tpu_custom_call.1} parent=1 // pred_region
      %55 = dma.done [#allocation7], 2048
    $region25: #{tpu_custom_call.1} parent=1 // pred_fallthru
      _
    %v56 = vld [vmem:[#allocation3] sm:$0xff]
    %v57 = vld [vmem:[#allocation3 + $0x8] sm:$0xff]
    %v58 = vld [vmem:[#allocation6] sm:$0xff]
    %v59 = vld [vmem:[#allocation6 + $0x8] sm:$0xff]
    %v60 = vld [vmem:[#allocation6 + $0x10] sm:$0xff]
    %v61 = vld [vmem:[#allocation6 + $0x18] sm:$0xff]
    %v62 = vld [vmem:[#allocation6 + $0x20] sm:$0xff]
    %v63 = vld [vmem:[#allocation6 + $0x28] sm:$0xff]
    %v64 = vld [vmem:[#allocation6 + $0x30] sm:$0xff]
    %v65 = vld [vmem:[#allocation6 + $0x38] sm:$0xff]
    %v66 = vld [vmem:[#allocation6 + $0x40] sm:$0xff]
    %v67 = vld [vmem:[#allocation6 + $0x48] sm:$0xff]
    %v68 = vld [vmem:[#allocation6 + $0x50] sm:$0xff]
    %v69 = vld [vmem:[#allocation6 + $0x58] sm:$0xff]
    %v70 = vld [vmem:[#allocation6 + $0x60] sm:$0xff]
    %v71 = vld [vmem:[#allocation6 + $0x68] sm:$0xff]
    %v72 = vld [vmem:[#allocation6 + $0x70] sm:$0xff]
    %v73 = vld [vmem:[#allocation6 + $0x78] sm:$0xff]
    %v74 = vld [vmem:[#allocation6 + $0x80] sm:$0xff]
    %v75 = vld [vmem:[#allocation6 + $0x88] sm:$0xff]
    %v76 = vld [vmem:[#allocation6 + $0x90] sm:$0xff]
    %v77 = vld [vmem:[#allocation6 + $0x98] sm:$0xff]
    %v78 = vld [vmem:[#allocation6 + $0xa0] sm:$0xff]
    %v79 = vld [vmem:[#allocation6 + $0xa8] sm:$0xff]
    %v80 = vld [vmem:[#allocation6 + $0xb0] sm:$0xff]
    %v81 = vld [vmem:[#allocation6 + $0xb8] sm:$0xff]
    %v82 = vld [vmem:[#allocation6 + $0xc0] sm:$0xff]
    %v83 = vld [vmem:[#allocation6 + $0xc8] sm:$0xff]
    %v84 = vld [vmem:[#allocation6 + $0xd0] sm:$0xff]
    %v85 = vld [vmem:[#allocation6 + $0xd8] sm:$0xff]
    %v86 = vld [vmem:[#allocation6 + $0xe0] sm:$0xff]
    %v87 = vld [vmem:[#allocation6 + $0xe8] sm:$0xff]
    %v88 = vld [vmem:[#allocation6 + $0xf0] sm:$0xff]
    %v89 = vld [vmem:[#allocation6 + $0xf8] sm:$0xff]
    %90 = vmatprep.subr.mxu0 %v59
    %91 = vmatpush1.msra.mxu0 %v58
    %92 = vmatprep.subr.mxu0 %v61
    %93 = vmatpush1.msra.mxu0 %v60
    %94 = vmatprep.subr.mxu0 %v63
    %95 = vmatpush1.msra.mxu0 %v62
    %96 = vmatprep.subr.mxu0 %v65
    %97 = vmatpush1.msra.mxu0 %v64
    %98 = vmatprep.subr.mxu0 %v67
    %99 = vmatpush1.msra.mxu0 %v66
    %100 = vmatprep.subr.mxu0 %v69
    %101 = vmatpush1.msra.mxu0 %v68
    %102 = vmatprep.subr.mxu0 %v71
    %103 = vmatpush1.msra.mxu0 %v70
    %104 = vmatprep.subr.mxu0 %v73
    %105 = vmatpush1.msra.mxu0 %v72
    %106 = vmatprep.subr.mxu0 %v75
    %107 = vmatpush1.msra.mxu0 %v74
    %108 = vmatprep.subr.mxu0 %v77
    %109 = vmatpush1.msra.mxu0 %v76
    %110 = vmatprep.subr.mxu0 %v79
    %111 = vmatpush1.msra.mxu0 %v78
    %112 = vmatprep.subr.mxu0 %v81
    %113 = vmatpush1.msra.mxu0 %v80
    %114 = vmatprep.subr.mxu0 %v83
    %115 = vmatpush1.msra.mxu0 %v82
    %116 = vmatprep.subr.mxu0 %v85
    %117 = vmatpush1.msra.mxu0 %v84
    %118 = vmatprep.subr.mxu0 %v87
    %119 = vmatpush1.msra.mxu0 %v86
    %120 = vmatprep.subr.mxu0 %v89
    %121 = vmatpush1.msra.mxu0 %v88
    %122 = vmatprep.subr.mxu0 0.0
    %123 = vmatpush1.msra.mxu0 0.0
    %124 = vmatprep.subr.mxu0 0.0
    %125 = vmatpush1.msra.mxu0 0.0
    %126 = vmatprep.subr.mxu0 0.0
    %127 = vmatpush1.msra.mxu0 0.0
    %128 = vmatprep.subr.mxu0 0.0
    %129 = vmatpush1.msra.mxu0 0.0
    %130 = vmatprep.subr.mxu0 0.0
    %131 = vmatpush1.msra.mxu0 0.0
    %132 = vmatprep.subr.mxu0 0.0
    %133 = vmatpush1.msra.mxu0 0.0
    %134 = vmatprep.subr.mxu0 0.0
    %135 = vmatpush1.msra.mxu0 0.0
    %136 = vmatprep.subr.mxu0 0.0
    %137 = vmatpush1.msra.mxu0 0.0
    %138 = vmatprep.subr.mxu0 0.0
    %139 = vmatpush1.msra.mxu0 0.0
    %140 = vmatprep.subr.mxu0 0.0
    %141 = vmatpush1.msra.mxu0 0.0
    %142 = vmatprep.subr.mxu0 0.0
    %143 = vmatpush1.msra.mxu0 0.0
    %144 = vmatprep.subr.mxu0 0.0
    %145 = vmatpush1.msra.mxu0 0.0
    %146 = vmatprep.subr.mxu0 0.0
    %147 = vmatpush1.msra.mxu0 0.0
    %148 = vmatprep.subr.mxu0 0.0
    %149 = vmatpush1.msra.mxu0 0.0
    %150 = vmatprep.subr.mxu0 0.0
    %151 = vmatpush1.msra.mxu0 0.0
    %152 = vmatprep.subr.mxu0 0.0
    %153 = vmatpush1.msra.mxu0 0.0
    %154 = vmatprep.mubr.f32.mxu0 0.0
    %155 = vmatmul.mubr.f32.gmra.mrb[0].mxu0 %v56
    %v156 = vpop.f32.mrb[0].mxu0
    %v157 = vadd.f32 0.0, %v156
    %v158 = vpop.f32.mrb[0].mxu0
    %v159 = vadd.f32 0.0, %v158
    %160 = vmatprep.mubr.f32.mxu0 0.0
    %161 = vmatmul.mubr.f32.gmra.mrb[0].mxu0 %v57
    %v162 = vpop.f32.mrb[0].mxu0
    %v163 = vadd.f32 0.0, %v162
    %v164 = vpop.f32.mrb[0].mxu0
    %v165 = vadd.f32 0.0, %v164
    %166 = vdwg.mxu0
    %v167 = vxor.u32 %v157, 2147483648
    %v168 = vxor.u32 %v163, 2147483648
    %v169 = vmul.f32 %v167, 1.442695
    %v170 = vpow.pop %v169
    %v171 = vmul.f32 %v168, 1.442695
    %v172 = vpow.pop %v171
    %v173 = vadd.f32 %v170, 1.0
    %v174 = vadd.f32 %v172, 1.0
    %v175 = vrcp.pop %v173
    %v176 = vmul.f32 1.0, %v175
    %v177 = vrcp.pop %v174
    %v178 = vmul.f32 1.0, %v177
    %v179 = vmul.f32 %v157, %v176
    %v180 = vmul.f32 %v163, %v178
    %v181 = vmul.f32 %v179, %v159
    %v182 = vmul.f32 %v180, %v165
    %v183 = vld [vmem:[#allocation8] sm:$0xff]
    %v184 = vld [vmem:[#allocation8 + $0x8] sm:$0xff]
    %v185 = vld [vmem:[#allocation8 + $0x10] sm:$0xff]
    %v186 = vld [vmem:[#allocation8 + $0x18] sm:$0xff]
    %v187 = vld [vmem:[#allocation8 + $0x20] sm:$0xff]
    %v188 = vld [vmem:[#allocation8 + $0x28] sm:$0xff]
    %v189 = vld [vmem:[#allocation8 + $0x30] sm:$0xff]
    %v190 = vld [vmem:[#allocation8 + $0x38] sm:$0xff]
    %v191 = vld [vmem:[#allocation8 + $0x40] sm:$0xff]
    %v192 = vld [vmem:[#allocation8 + $0x48] sm:$0xff]
    %v193 = vld [vmem:[#allocation8 + $0x50] sm:$0xff]
    %v194 = vld [vmem:[#allocation8 + $0x58] sm:$0xff]
    %v195 = vld [vmem:[#allocation8 + $0x60] sm:$0xff]
    %v196 = vld [vmem:[#allocation8 + $0x68] sm:$0xff]
    %v197 = vld [vmem:[#allocation8 + $0x70] sm:$0xff]
    %v198 = vld [vmem:[#allocation8 + $0x78] sm:$0xff]
    %199 = vmatprep.subr.mxu0 0.0
    %200 = vmatpush1.msra.mxu0 %v183
    %201 = vmatprep.subr.mxu0 0.0
    %202 = vmatpush1.msra.mxu0 %v184
    %203 = vmatprep.subr.mxu0 0.0
    %204 = vmatpush1.msra.mxu0 %v185
    %205 = vmatprep.subr.mxu0 0.0
    %206 = vmatpush1.msra.mxu0 %v186
    %207 = vmatprep.subr.mxu0 0.0
    %208 = vmatpush1.msra.mxu0 %v187
    %209 = vmatprep.subr.mxu0 0.0
    %210 = vmatpush1.msra.mxu0 %v188
    %211 = vmatprep.subr.mxu0 0.0
    %212 = vmatpush1.msra.mxu0 %v189
    %213 = vmatprep.subr.mxu0 0.0
    %214 = vmatpush1.msra.mxu0 %v190
    %215 = vmatprep.subr.mxu0 0.0
    %216 = vmatpush1.msra.mxu0 %v191
    %217 = vmatprep.subr.mxu0 0.0
    %218 = vmatpush1.msra.mxu0 %v192
    %219 = vmatprep.subr.mxu0 0.0
    %220 = vmatpush1.msra.mxu0 %v193
    %221 = vmatprep.subr.mxu0 0.0
    %222 = vmatpush1.msra.mxu0 %v194
    %223 = vmatprep.subr.mxu0 0.0
    %224 = vmatpush1.msra.mxu0 %v195
    %225 = vmatprep.subr.mxu0 0.0
    %226 = vmatpush1.msra.mxu0 %v196
    %227 = vmatprep.subr.mxu0 0.0
    %228 = vmatpush1.msra.mxu0 %v197
    %229 = vmatprep.subr.mxu0 0.0
    %230 = vmatpush1.msra.mxu0 %v198
    %231 = vmatprep.subr.mxu0 0.0
    %232 = vmatpush1.msra.mxu0 0.0
    %233 = vmatprep.subr.mxu0 0.0
    %234 = vmatpush1.msra.mxu0 0.0
    %235 = vmatprep.subr.mxu0 0.0
    %236 = vmatpush1.msra.mxu0 0.0
    %237 = vmatprep.subr.mxu0 0.0
    %238 = vmatpush1.msra.mxu0 0.0
    %239 = vmatprep.subr.mxu0 0.0
    %240 = vmatpush1.msra.mxu0 0.0
    %241 = vmatprep.subr.mxu0 0.0
    %242 = vmatpush1.msra.mxu0 0.0
    %243 = vmatprep.subr.mxu0 0.0
    %244 = vmatpush1.msra.mxu0 0.0
    %245 = vmatprep.subr.mxu0 0.0
    %246 = vmatpush1.msra.mxu0 0.0
    %247 = vmatprep.subr.mxu0 0.0
    %248 = vmatpush1.msra.mxu0 0.0
    %249 = vmatprep.subr.mxu0 0.0
    %250 = vmatpush1.msra.mxu0 0.0
    %251 = vmatprep.subr.mxu0 0.0
    %252 = vmatpush1.msra.mxu0 0.0
    %253 = vmatprep.subr.mxu0 0.0
    %254 = vmatpush1.msra.mxu0 0.0
    %255 = vmatprep.subr.mxu0 0.0
    %256 = vmatpush1.msra.mxu0 0.0
    %257 = vmatprep.subr.mxu0 0.0
    %258 = vmatpush1.msra.mxu0 0.0
    %259 = vmatprep.subr.mxu0 0.0
    %260 = vmatpush1.msra.mxu0 0.0
    %261 = vmatprep.subr.mxu0 0.0
    %262 = vmatpush1.msra.mxu0 0.0
    %263 = vmatprep.mubr.f32.mxu0 0.0
    %264 = vmatmul.mubr.f32.gmra.mrb[0].mxu0 %v181
    %v265 = vpop.f32.mrb[0].mxu0
    %v266 = vadd.f32 0.0, %v265
    %v267 = vpop.f32.mrb[0].mxu0
    %268 = vmatprep.mubr.f32.mxu0 0.0
    %269 = vmatmul.mubr.f32.gmra.mrb[0].mxu0 %v182
    %v270 = vpop.f32.mrb[0].mxu0
    %v271 = vadd.f32 0.0, %v270
    %v272 = vpop.f32.mrb[0].mxu0
    %273 = vdwg.mxu0
    %p274 = scmp.eq.s32.totalorder 0, 0
    // Predicated region
    $region26: #{tpu_custom_call.1} parent=1 // pred_check
      %p275 = pneg %p274
    $region27: #{tpu_custom_call.1} parent=1 // pred_check_branch
      %277 = sbr.rel (%p275) target = $region29
    $region28: #{tpu_custom_call.1} parent=1 // pred_region
      %278 = vst [vmem:[#allocation2] sm:$0xff] %v266
      %279 = vst [vmem:[#allocation2 + $0x8] sm:$0xff] %v271
    $region29: #{tpu_custom_call.1} parent=1 // pred_fallthru
      _
    %p280 = scmp.gt.s32.totalorder 0, 0
    // Predicated region
    $region30: #{tpu_custom_call.1} parent=1 // pred_check
      %p281 = pneg %p280
    $region31: #{tpu_custom_call.1} parent=1 // pred_check_branch
      %283 = sbr.rel (%p281) target = $region33
    $region32: #{tpu_custom_call.1} parent=1 // pred_region
      %v284 = vld [vmem:[#allocation2] sm:$0xff]
      %v285 = vld [vmem:[#allocation2 + $0x8] sm:$0xff]
      %v286 = vadd.f32 %v284, %v266
      %v287 = vadd.f32 %v285, %v271
      %288 = vst [vmem:[#allocation2] sm:$0xff] %v286
      %289 = vst [vmem:[#allocation2 + $0x8] sm:$0xff] %v287
    $region33: #{tpu_custom_call.1} parent=1 // pred_fallthru
      _
    // Predicated region
    $region34: #{tpu_custom_call.1} parent=1 // pred_check
      %p290 = pneg %p274
    $region35: #{tpu_custom_call.1} parent=1 // pred_check_branch
      %292 = sbr.rel (%p290) target = $region37
    $region36: #{tpu_custom_call.1} parent=1 // pred_region
      %v293 = vld [vmem:[#allocation2] sm:$0xff]
      %v294 = vld [vmem:[#allocation2 + $0x8] sm:$0xff]
      %295 = vst [vmem:[#allocation9] sm:$0xff] %v293
      %296 = vst [vmem:[#allocation9 + $0x8] sm:$0xff] %v294
    $region37: #{tpu_custom_call.1} parent=1 // pred_fallthru
      _
    // Predicated region
    $region38: #{tpu_custom_call.1} parent=1 // pred_check
      _
    $region39: #{tpu_custom_call.1} parent=1 // pred_check_branch
      %298 = sbr.rel (0) target = $region41
    $region40: #{tpu_custom_call.1} parent=1 // pred_region
      %s300 = ssub.s32 256, 256
      %301 = vsyncadd [#allocation5], %s300
      %s302 = sshll.u32 [#allocation9], 4
      %s303 = int_to_ptr.vmem [resolvable:$true] %s302
      %308 = dma.vmem_to_hbm [thread:$0]  %s303, 256, %s3, [#allocation5], 128, 128, 8
    $region41: #{tpu_custom_call.1} parent=1 // pred_fallthru
      _
    // Predicated region
    $region42: #{tpu_custom_call.1} parent=1 // pred_check
      _
    $region43: #{tpu_custom_call.1} parent=1 // pred_check_branch
      %310 = sbr.rel (0) target = $region45
    $region44: #{tpu_custom_call.1} parent=1 // pred_region
      %311 = dma.done [#allocation5], 256
    $region45: #{tpu_custom_call.1} parent=1 // pred_fallthru
      _
    %312 = vsyncpa [#allocation4], 1
    %313 = vsyncpa [#allocation7], 1
    %314 = vsyncpa [#allocation5], 1

</llo_original>
